<compile_context>
chip_gen: v6e
topology: v6e:2x2x1
jax: 0.10.0
libtpu: 0.0.40
codegen_flags: <defaults>
</compile_context>

<pallas_src>
import functools

import jax
import jax.numpy as jnp
from jax.experimental import pallas as pl
from jax.experimental.pallas import tpu as pltpu

REDUCTIONS = ("sum", "mean", "min", "max", "product")


def _round_up(x: int, m: int) -> int:
    return (x + m - 1) // m * m


# ---------------------------------------------------------------------------
# Kernel
# ---------------------------------------------------------------------------
def _reduce_kernel(weights_ref, costs_ref, out_ref, *, method: str, num_costs: int):
    """Weighted stack + reduction over the leading (K) axis.

    weights_ref : SMEM (K,)        float32 scalar weights
    costs_ref   : VMEM (K, tn, tm) tile of stacked cost matrices (f32 or bf16)
    out_ref     : VMEM (tn, tm)    reduced output tile
    """

    def load(k):
        x = costs_ref[k]
        if x.dtype != jnp.float32:
            x = x.astype(jnp.float32)  # accumulate in f32 even for bf16 inputs
        return x

    if method == "product":
        # prod_k (w_k * c_k) == (prod_k w_k) * (prod_k c_k): fold the scalar
        # weight product out of the loop (saves K-1 full-tile VPU multiplies).
        acc = load(0)
        for k in range(1, num_costs):
            acc = acc * load(k)
        wprod = weights_ref[0]
        for k in range(1, num_costs):
            wprod = wprod * weights_ref[k]
        acc = acc * wprod
    else:
        acc = load(0) * weights_ref[0]
        # K is small and static -> unrolled Python loop, one k-slice live at a time.
        for k in range(1, num_costs):
            x = load(k) * weights_ref[k]
            if method in ("sum", "mean"):
                acc = acc + x
            elif method == "min":
                acc = jnp.minimum(acc, x)
            elif method == "max":
                acc = jnp.maximum(acc, x)
            else:
                raise NotImplementedError(f"Reduction method '{method}' not implemented!")
        if method == "mean":
            acc = acc * (1.0 / num_costs)

    out_ref[...] = acc.astype(out_ref.dtype)


# ---------------------------------------------------------------------------
# Hardware queries (defensive: never fail, never over-claim)
# ---------------------------------------------------------------------------
def _num_tensorcores() -> int:
    """TensorCores this kernel's grid can be megacore-sharded across."""
    try:
        info = pltpu.get_tpu_info()
    except Exception:
        return 1
    for attr in ("num_cores", "core_count", "num_tensorcores", "tensorcore_count"):
        v = getattr(info, attr, None)
        if isinstance(v, int) and v > 0:
            return v
    return 1


def _vmem_capacity_bytes(cores: int) -> int:
    """Per-TensorCore VMEM capacity, clamped against per-chip reporting."""
    try:
        v = int(pltpu.get_tpu_info().vmem_capacity_bytes)
    except Exception:
        v = 0
    if v <= 0:
        return 64 << 20  # conservative (v7x-sized) default
    if cores > 1 and v > (64 << 20):
        v //= cores  # guard: dual-TC part reporting summed per-chip capacity
    return min(v, 128 << 20)


def _pick_lane_width(p: int):
    """Largest multiple of 128 dividing `p` (<= 2048) that still leaves >= 8
    rows (dense (8,128) vreg tiles); falls back to the smallest divisor."""
    best = None
    best_rows_ok = None
    c = 128
    while c <= min(p, 2048):
        if p % c == 0:
            if best is None:
                best = c
            if p // c >= 8:
                best_rows_ok = c
        c += 128
    return best_rows_ok if best_rows_ok is not None else best


# ---------------------------------------------------------------------------
# Wrapper
# ---------------------------------------------------------------------------
def _reduce_plane(costs: jax.Array, weights: jax.Array, method: str,
                  *, tn, tm, out_dtype) -> jax.Array:
    K, N, M = costs.shape
    in_bytes = jnp.dtype(costs.dtype).itemsize
    out_bytes = jnp.dtype(out_dtype).itemsize
    sub = max(8, 32 // in_bytes)  # dtype-native sublane count (f32:8, bf16:16, int8:32)

    cores = _num_tensorcores()
    vmem_cap = _vmem_capacity_bytes(cores)
    # Double-buffered working set may use ~half of VMEM minus headroom for
    # compiler-internal scratch (v7x: ~28 MiB, v5e/v6e: ~60 MiB).
    tile_budget = max(8 << 20, vmem_cap // 2 - (4 << 20))

    if tn is None and tm is None:
        # ---- lane (last-dim) tile ----
        if M >= 128 and M % 128 == 0:
            tm_ = min(M, 2048)
        elif M > 128:
            tm_ = min((M // 128) * 128, 2048)  # ragged last block along M
        else:
            tm_ = M  # sub-128 lane dim: masked stores (rare fallback)

        total_bytes = (K * in_bytes + out_bytes) * N * M
        if total_bytes <= (4 << 20):
            # Small problem: split along N into a couple of blocks so the DMA /
            # compute / writeback pipeline overlaps and both TCs on dual-core
            # chips get work; never go below the native sublane tile.
            nsplit = max(2, cores) if N >= 2 * sub else 1
            tn_ = N if nsplit == 1 else max(sub, _round_up(pl.cdiv(N, nsplit), sub))
        else:
            # Memory-bound streaming: grow the sublane tile until the
            # double-buffered working set hits the budget.
            per_row = 2 * (K * in_bytes + out_bytes) * tm_  # dbl-buffered in + out
            tn_cap = max(sub, (tile_budget // per_row) // sub * sub)
            if N <= sub:
                tn_ = N
            elif tn_cap >= N:
                tn_ = N if N % sub == 0 else (N // sub) * sub
            else:
                tn_ = min(tn_cap, (N // sub) * sub, 1024)
            tn_ = max(tn_, min(N, sub))
            # Dual-TC chips only: ensure at least `cores` blocks, split evenly.
            if (cores > 1 and N > sub
                    and pl.cdiv(N, tn_) * pl.cdiv(M, tm_) < cores):
                tn_ = min(tn_, max(sub, _round_up(pl.cdiv(N, cores), sub)))
    else:
        tn_ = min(tn if tn is not None else N, N)
        tm_ = min(tm if tm is not None else M, M)
        # Snap to legal tile multiples unless covering the full dimension.
        if tn_ < N:
            tn_ = max(sub, (tn_ // sub) * sub) if N > sub else N
        if tm_ < M:
            tm_ = max(128, (tm_ // 128) * 128) if M > 128 else M

    grid = (pl.cdiv(N, tn_), pl.cdiv(M, tm_))

    # Double-buffered inputs + output working set; 1.25x + small headroom.
    block_bytes = 2 * (K * in_bytes + out_bytes) * tn_ * tm_
    vmem_limit = int(min(max(vmem_cap - (2 << 20), 8 << 20),
                         max(block_bytes + block_bytes // 4 + (2 << 20), 8 << 20)))

    kernel = functools.partial(_reduce_kernel, method=method, num_costs=K)

    return pl.pallas_call(
        kernel,
        out_shape=jax.ShapeDtypeStruct((N, M), out_dtype),
        grid=grid,
        in_specs=[
            # weights live in SMEM (tiny scalar table, read per-k).
            pl.BlockSpec(memory_space=pltpu.MemorySpace.SMEM),
            # full K extent per tile; tile the (N, M) plane (ragged last blocks
            # are fine: the reduction never mixes cells across N/M).
            pl.BlockSpec((K, tn_, tm_), lambda i, j: (0, i, j)),
        ],
        out_specs=pl.BlockSpec((tn_, tm_), lambda i, j: (i, j)),
        compiler_params=pltpu.CompilerParams(
            dimension_semantics=("parallel", "parallel"),
            vmem_limit_bytes=vmem_limit,
        ),
    )(weights, costs)


def reduce_cost(costs: jax.Array, weights, method: str,
                *, tn: int | None = None, tm: int | None = None,
                out_dtype=jnp.float32) -> jax.Array:
    """Pallas equivalent of Reduce.forward given precomputed sub-cost matrices.

    costs     : (K, N, M) stacked cost matrices (float32 or bfloat16)
    weights   : (K,) per-cost scalar weights
    method    : one of "sum", "mean", "min", "max", "product"
    out_dtype : output dtype (default f32, matching the PyTorch reference)
    """
    assert method in REDUCTIONS
    K, N, M = costs.shape
    weights = jnp.asarray(weights, jnp.float32)
    assert weights.shape == (K,)

    # Lane-density lever: if M is not lane-friendly (detection counts are often
    # small / ragged), reshape the contiguous (N, M) plane into (R, C) with C a
    # multiple of 128 so output stores stay unmasked. The reshape is free
    # (row-major contiguous) and the reduction is purely over K, so it never
    # mixes cells across the plane.
    if tn is None and tm is None and (M < 128 or M % 128 != 0) and N * M >= 256:
        c = _pick_lane_width(N * M)
        if c is not None:
            r = (N * M) // c
            out = _reduce_plane(costs.reshape(K, r, c), weights, method,
                                tn=None, tm=None, out_dtype=out_dtype)
            return out.reshape(N, M)

    return _reduce_plane(costs, weights, method, tn=tn, tm=tm, out_dtype=out_dtype)


def reduce_cost_ref(costs, weights, method):
    """Pure-JAX reference mirroring the PyTorch forward."""
    res = costs.astype(jnp.float32) * weights[:, None, None]
    if method == "sum":
        return res.sum(axis=0)
    if method == "mean":
        return res.mean(axis=0)
    if method == "min":
        return res.min(axis=0)
    if method == "max":
        return res.max(axis=0)
    if method == "product":
        return res.prod(axis=0)
    raise NotImplementedError(method)


if __name__ == "__main__":
    key = jax.random.PRNGKey(0)
    k1, k2, k3, k4 = jax.random.split(key, 4)

    ok = True

    # 1) Synthetic setup: K=3 sub-cost modules, N=16 tracklets, M=256 detections.
    K, N, M = 3, 16, 256
    costs = jax.random.uniform(k1, (K, N, M), dtype=jnp.float32)
    weights = jnp.array([1.0, 0.5, 2.0], dtype=jnp.float32)
    for method in REDUCTIONS:
        out = reduce_cost(costs, weights, method)
        jax.block_until_ready(out)
        ref = reduce_cost_ref(costs, weights, method)
        if not jnp.allclose(out, ref, rtol=1e-6, atol=1e-6):
            ok = False
            print(f"MISMATCH (small/auto) method={method}")

    # 2) Explicit tiles + ragged last blocks (no padding materialized).
    K2, N2, M2 = 2, 100, 384
    costs2 = jax.random.uniform(k2, (K2, N2, M2), dtype=jnp.float32)
    weights2 = jnp.array([0.75, 1.25], dtype=jnp.float32)
    for method in REDUCTIONS:
        out = reduce_cost(costs2, weights2, method, tn=64, tm=256)
        jax.block_until_ready(out)
        ref = reduce_cost_ref(costs2, weights2, method)
        if not jnp.allclose(out, ref, rtol=1e-6, atol=1e-6):
            ok = False
            print(f"MISMATCH (tiled/ragged) method={method}")

    # 3) bf16 inputs: kernel upcasts to f32 before reducing.
    out = reduce_cost(costs.astype(jnp.bfloat16), weights, "sum")
    jax.block_until_ready(out)
    ref = reduce_cost_ref(costs.astype(jnp.bfloat16), weights, "sum")
    if not jnp.allclose(out, ref, rtol=1e-5, atol=1e-5):
        ok = False
        print("MISMATCH (bf16 sum)")

    # 4) M < 128: lane-dense flatten path (reshape (K,32,64) -> (K,8,256)).
    K3, N3, M3 = 2, 32, 64
    costs3 = jax.random.uniform(k3, (K3, N3, M3), dtype=jnp.float32)
    weights3 = jnp.array([1.5, 0.25], dtype=jnp.float32)
    for method in ("sum", "min", "product"):
        out = reduce_cost(costs3, weights3, method)
        jax.block_until_ready(out)
        ref = reduce_cost_ref(costs3, weights3, method)
        if not jnp.allclose(out, ref, rtol=1e-6, atol=1e-6):
            ok = False
            print(f"MISMATCH (flatten) method={method}")

    # 5) Awkward shape with no 128-divisible flattening (masked-store fallback).
    K4, N4, M4 = 2, 10, 96
    costs4 = jax.random.uniform(k4, (K4, N4, M4), dtype=jnp.float32)
    weights4 = jnp.array([0.5, 2.0], dtype=jnp.float32)
    out = reduce_cost(costs4, weights4, "max")
    jax.block_until_ready(out)
    ref = reduce_cost_ref(costs4, weights4, "max")
    if not jnp.allclose(out, ref, rtol=1e-6, atol=1e-6):
        ok = False
        print("MISMATCH (fallback max)")

    # 6) Optional bf16 output (reduced write traffic).
    out = reduce_cost(costs, weights, "sum", out_dtype=jnp.bfloat16)
    jax.block_until_ready(out)
    ref = reduce_cost_ref(costs, weights, "sum")
    if not jnp.allclose(out.astype(jnp.float32), ref, rtol=1e-2, atol=1e-2):
        ok = False
        print("MISMATCH (bf16 out_dtype)")

    if ok:
        print("KERNEL_OK")
</pallas_src>

<mosaic_0001>
module attributes {stable_mosaic.version = 11 : i64} {
  func.func @_reduce_kernel(%arg0: i32, %arg1: i32, %arg2: memref<3xf32, #tpu.memory_space<smem>>, %arg3: memref<3x8x256xf32, #tpu.memory_space<vmem>>, %arg4: memref<8x256xf32, #tpu.memory_space<vmem>>) attributes {dimension_semantics = [#tpu.dimension_semantics<parallel>, #tpu.dimension_semantics<parallel>], iteration_bounds = array<i64: 2, 1>, scalar_prefetch = 0 : i64, scratch_operands = 0 : i64, tpu.core_type = #tpu.core_type<tc>, window_params = [{transform_indices = @transform_0, window_bounds = array<i64: 3>}, {transform_indices = @transform_1, window_bounds = array<i64: 3, 8, 256>}, {transform_indices = @transform_2, window_bounds = array<i64: 8, 256>}]} {
    %c0 = arith.constant 0 : index
    %c0_0 = arith.constant 0 : index
    %c0_1 = arith.constant 0 : index
    %0 = vector.load %arg3[%c0, %c0_0, %c0_1] : memref<3x8x256xf32, #tpu.memory_space<vmem>>, vector<1x8x256xf32>
    %1 = vector.shape_cast %0 : vector<1x8x256xf32> to vector<8x256xf32>
    %c0_2 = arith.constant 0 : index
    %2 = memref.load %arg2[%c0_2] : memref<3xf32, #tpu.memory_space<smem>>
    %3 = vector.broadcast %2 : f32 to vector<8x256xf32>
    %4 = arith.mulf %1, %3 : vector<8x256xf32>
    %c1 = arith.constant 1 : index
    %c0_3 = arith.constant 0 : index
    %c0_4 = arith.constant 0 : index
    %5 = vector.load %arg3[%c1, %c0_3, %c0_4] : memref<3x8x256xf32, #tpu.memory_space<vmem>>, vector<1x8x256xf32>
    %6 = vector.shape_cast %5 : vector<1x8x256xf32> to vector<8x256xf32>
    %c1_5 = arith.constant 1 : index
    %7 = memref.load %arg2[%c1_5] : memref<3xf32, #tpu.memory_space<smem>>
    %8 = vector.broadcast %7 : f32 to vector<8x256xf32>
    %9 = arith.mulf %6, %8 : vector<8x256xf32>
    %10 = arith.addf %4, %9 : vector<8x256xf32>
    %c2 = arith.constant 2 : index
    %c0_6 = arith.constant 0 : index
    %c0_7 = arith.constant 0 : index
    %11 = vector.load %arg3[%c2, %c0_6, %c0_7] : memref<3x8x256xf32, #tpu.memory_space<vmem>>, vector<1x8x256xf32>
    %12 = vector.shape_cast %11 : vector<1x8x256xf32> to vector<8x256xf32>
    %c2_8 = arith.constant 2 : index
    %13 = memref.load %arg2[%c2_8] : memref<3xf32, #tpu.memory_space<smem>>
    %14 = vector.broadcast %13 : f32 to vector<8x256xf32>
    %15 = arith.mulf %12, %14 : vector<8x256xf32>
    %16 = arith.addf %10, %15 : vector<8x256xf32>
    %c0_9 = arith.constant 0 : index
    %c0_10 = arith.constant 0 : index
    %17 = vector.load %arg4[%c0_9, %c0_10] : memref<8x256xf32, #tpu.memory_space<vmem>>, vector<8x256xf32>
    tpu.vector_store %arg4[%c0_9, %c0_10], %16 {strides = array<i32>} : memref<8x256xf32, #tpu.memory_space<vmem>>, vector<8x256xf32>,
    return
  }
  func.func @transform_0(%arg0: i32, %arg1: i32) -> i32 {
    %c0_i32 = arith.constant 0 : i32
    %c0_i32_0 = arith.constant 0 : i32
    return %c0_i32 : i32
  }
  func.func @transform_1(%arg0: i32, %arg1: i32) -> (i32, i32, i32) {
    %c0_i32 = arith.constant 0 : i32
    %c0_i32_0 = arith.constant 0 : i32
    return %c0_i32, %arg0, %arg1 : i32, i32, i32
  }
  func.func @transform_2(%arg0: i32, %arg1: i32) -> (i32, i32) {
    %c0_i32 = arith.constant 0 : i32
    return %arg0, %arg1 : i32, i32
  }
}

</mosaic_0001>

<llo_original>
// kernel: tpu_custom_call.1
$region0: #{tpu_custom_call.1}
  #allocation0 [shape = 'u32[]', space=smem, size = 0x4, offset = 0x4, fixed_abs, tag = 'smem constant byte address 0x4 - core index']
  #allocation1 [shape = 'u32[144,128]{1,0:T(1,128)}', space=vmem, size = 0x12000, scoped, tag = 'internal scratch']
  %s0 = inlined_call_operand.hbm [shape: f32[3], index: 0, kind: input, shape index: {}]
  %s1 = inlined_call_operand.hbm [shape: f32[3,16,256], index: 1, kind: input, shape index: {}]
  %s2 = inlined_call_operand.hbm [shape: f32[16,256], index: 2, kind: output, shape index: {}]
  %s3 = sld [smem:[#allocation0]]
  $region49: #{tpu_custom_call.1} parent=0
    _
  %s5 = ssub.s32 1, %s3
  %s6 = scalar_select 0, %s5, %s3
  $region1: #{tpu_custom_call.1} parent=0
    #allocation2 [shape = 'u8[512]{0}', space=smem, size = 0x200, scoped, tag = 'input window, operand 0, single buffered']
    #allocation3 [shape = 's32[2]{0}', space=sflag, size = 0x8, scoped, tag = 'scoped memory for tpu_custom_call.1']
    #allocation4 [shape = 's32[2]{0}', space=sflag, size = 0x8, scoped, tag = 'scoped memory for tpu_custom_call.1']
    #allocation5 [shape = 's32[2]{0}', space=sflag, size = 0x8, scoped, tag = 'scoped memory for tpu_custom_call.1']
    #allocation6 [shape = 'u8[49152]{0}', space=vmem, size = 0xc000, scoped, tag = 'input window, operand 1']
    #allocation7 [shape = 'u8[16384]{0}', space=vmem, size = 0x4000, scoped, tag = 'output window, operand 0']
    %7 = vsyncpa [#allocation5], 0
    %8 = vsyncpa [#allocation3], 0
    %s9 = scalar_lea.sflag [#allocation3], 1
    %10 = vsyncpa %s9, 0
    %11 = vsyncpa [#allocation4], 0
    %s12 = scalar_lea.sflag [#allocation4], 1
    %13 = vsyncpa %s12, 0
    loop: start=0, step=1, limit=4
    $region2: #{tpu_custom_call.1} parent=1 // loop_pre_header
      _
    $region3: #{tpu_custom_call.1} parent=1 // loop_header
      %s15 = sphi 0, %s19
      %p16 = scmp.ge.s32.totalorder %s15, 4
      %s22 = sphi 0, %s34
      %s23 = sphi 0, %s30
      %s24 = sphi 0, %s22
      %s25 = sphi 0, %s23
      %s26 = sphi 0, %s24
      %s27 = sphi 0, %s25
      %s35 = sphi 0, %s35
      %s37 = sphi 0, %s35
      %s38 = sphi 0, %s37
      %s52 = sphi 0, %s38
      %s60 = sphi 0, %s62
      %s63 = sphi 0, %s60
      %s64 = sphi 0, %s63
      %s80 = sphi 0, %s64
      %s88 = sphi 0, %s90
      %s91 = sphi 0, %s88
      %s92 = sphi 0, %s91
      %s108 = sphi 0, %s92
    $region4: #{tpu_custom_call.1} parent=1 // loop_header_branch
      %18 = sbr.rel (%p16) target = $region8
    $region5: #{tpu_custom_call.1} parent=1 // loop_body
      %s20 = ssub.s32 %s15, 1
      %s21 = ssub.s32 %s15, 2
      %s28 = sadd.s32 1, %s23
      %p29 = scmp.ge.s32.totalorder %s28, 1
      %s30 = scalar_select %p29, 0, %s28
      %s31 = sadd.s32 1, %s22
      %s32 = scalar_select %p29, %s31, %s22
      %p33 = scmp.ge.s32.totalorder %s32, 2
      %s34 = scalar_select %p33, 0, %s32
      %s36 = sadd.s32 %s35, 1
      %p39 = scmp.eq.s32.totalorder %s15, 1
      %p40 = scmp.ne.s32.totalorder %s35, %s37
      %p41 = scmp.eq.s32.totalorder %s15, 0
      %p42 = por %p40, %p41
      %p43 = scmp.ne.s32.totalorder %s35, %s37
      %p44 = scmp.eq.s32.totalorder %s20, 1
      %p45 = por %p43, %p44
      %p46 = scmp.ne.s32.totalorder %s37, %s38
      %p47 = scmp.eq.s32.totalorder %s20, 0
      %p48 = por %p46, %p47
      %p49 = scmp.ne.s32.totalorder %s37, %s38
      %p50 = scmp.eq.s32.totalorder %s21, 1
      %p51 = por %p49, %p50
      %p53 = scmp.ne.s32.totalorder %s38, %s52
      %p54 = scmp.eq.s32.totalorder %s21, 0
      %p55 = por %p53, %p54
      %s56 = ssub.s32 %s22, %s34
      %s57 = ssub.s32 %s23, %s30
      %s58 = sor.u32 %s56, %s57
      %p59 = scmp.eq.s32.totalorder %s58, 0
      %s61 = sadd.s32 %s60, 1
      %s62 = scalar_select %p59, %s60, %s61
      %p65 = pneg %p59
      %p66 = scmp.eq.s32.totalorder %s15, 1
      %p67 = por %p65, %p66
      %p68 = scmp.ne.s32.totalorder %s60, %s63
      %p69 = scmp.eq.s32.totalorder %s15, 0
      %p70 = por %p68, %p69
      %p71 = scmp.ne.s32.totalorder %s60, %s63
      %p72 = scmp.eq.s32.totalorder %s20, 1
      %p73 = por %p71, %p72
      %p74 = scmp.ne.s32.totalorder %s63, %s64
      %p75 = scmp.eq.s32.totalorder %s20, 0
      %p76 = por %p74, %p75
      %p77 = scmp.ne.s32.totalorder %s63, %s64
      %p78 = scmp.eq.s32.totalorder %s21, 1
      %p79 = por %p77, %p78
      %p81 = scmp.ne.s32.totalorder %s64, %s80
      %p82 = scmp.eq.s32.totalorder %s21, 0
      %p83 = por %p81, %p82
      %s84 = ssub.s32 %s22, %s34
      %s85 = ssub.s32 %s23, %s30
      %s86 = sor.u32 %s84, %s85
      %p87 = scmp.eq.s32.totalorder %s86, 0
      %s89 = sadd.s32 %s88, 1
      %s90 = scalar_select %p87, %s88, %s89
      %p93 = pneg %p87
      %p94 = scmp.eq.s32.totalorder %s15, 1
      %p95 = por %p93, %p94
      %p96 = scmp.ne.s32.totalorder %s88, %s91
      %p97 = scmp.eq.s32.totalorder %s15, 0
      %p98 = por %p96, %p97
      %p99 = scmp.ne.s32.totalorder %s88, %s91
      %p100 = scmp.eq.s32.totalorder %s20, 1
      %p101 = por %p99, %p100
      %p102 = scmp.ne.s32.totalorder %s91, %s92
      %p103 = scmp.eq.s32.totalorder %s20, 0
      %p104 = por %p102, %p103
      %p105 = scmp.ne.s32.totalorder %s91, %s92
      %p106 = scmp.eq.s32.totalorder %s21, 1
      %p107 = por %p105, %p106
      %p109 = scmp.ne.s32.totalorder %s92, %s108
      %p110 = scmp.eq.s32.totalorder %s21, 0
      %p111 = por %p109, %p110
      %p112 = scmp.le.s32.totalorder 1, %s15
      %p113 = scmp.lt.s32.totalorder %s15, 3
      %p114 = pnand %p112, %p113
      %p115 = pneg %p114
      // Predicated region
      $region9: #{tpu_custom_call.1} parent=5 // pred_check
        _
      $region10: #{tpu_custom_call.1} parent=5 // pred_check_branch
        %117 = sbr.rel (%p114) target = $region12
      $region11: #{tpu_custom_call.1} parent=5 // pred_region
        %s118 = ssub.s32 %s15, 1
        // Predicated region
        $region13: #{tpu_custom_call.1} parent=11 // pred_check
          %p119 = pneg %p48
        $region14: #{tpu_custom_call.1} parent=11 // pred_check_branch
          %121 = sbr.rel (%p119) target = $region16
        $region15: #{tpu_custom_call.1} parent=11 // pred_region
          %s123 = ssub.s32 16, 16
          %124 = vsyncadd [#allocation5], %s123
          %127 = dma.hbm_to_smem %s0, 16, [#allocation2], [#allocation5]
        $region16: #{tpu_custom_call.1} parent=11 // pred_fallthru
          _
      $region12: #{tpu_custom_call.1} parent=5 // pred_fallthru
        _
      %p128 = scmp.lt.s32.totalorder %s15, 2
      // Predicated region
      $region17: #{tpu_custom_call.1} parent=5 // pred_check
        %p129 = pneg %p128
      $region18: #{tpu_custom_call.1} parent=5 // pred_check_branch
        %131 = sbr.rel (%p129) target = $region20
      $region19: #{tpu_custom_call.1} parent=5 // pred_region
        // Predicated region
        $region21: #{tpu_custom_call.1} parent=19 // pred_check
          %p132 = pneg %p70
        $region22: #{tpu_custom_call.1} parent=19 // pred_check_branch
          %134 = sbr.rel (%p132) target = $region24
        $region23: #{tpu_custom_call.1} parent=19 // pred_region
          %s135 = sand.u32 %s60, 1
          %s136 = scalar_lea.sflag [#allocation3], %s135
          %s137 = sand.u32 %s60, 1
          %s138 = smul.addr %s137, 48
          %s139 = scalar_lea.vmem [#allocation6], %s138
          %s140 = smul.u32 2, %s23
          %s142 = ssub.s32 768, 768
          %143 = vsyncadd %s136, %s142
          %s144 = smul.addr %s22, 2
          %s145 = sadd.s32 %s140, %s144
          %s146 = smul.addr %s145, 128
          %s147 = scalar_lea.hbm %s1, %s146
          %s148 = sshll.u32 %s139, 4
          %s149 = int_to_ptr.vmem [resolvable:$true] %s148
          %154 = dma.hbm_to_vmem [thread:$0]  %s147, 768, %s149, %s136, 512, 256, 16
        $region24: #{tpu_custom_call.1} parent=19 // pred_fallthru
          _
      $region20: #{tpu_custom_call.1} parent=5 // pred_fallthru
        _
      %p155 = scmp.le.s32.totalorder 1, %s15
      %p156 = scmp.lt.s32.totalorder %s15, 3
      %p157 = pnand %p155, %p156
      %p158 = pneg %p157
      // Predicated region
      $region25: #{tpu_custom_call.1} parent=5 // pred_check
        _
      $region26: #{tpu_custom_call.1} parent=5 // pred_check_branch
        %160 = sbr.rel (%p157) target = $region28
      $region27: #{tpu_custom_call.1} parent=5 // pred_region
        %s161 = ssub.s32 %s15, 1
        // Predicated region
        $region29: #{tpu_custom_call.1} parent=27 // pred_check
          %p162 = pneg %p48
        $region30: #{tpu_custom_call.1} parent=27 // pred_check_branch
          %164 = sbr.rel (%p162) target = $region32
        $region31: #{tpu_custom_call.1} parent=27 // pred_region
          %165 = dma.done [#allocation5], 16
        $region32: #{tpu_custom_call.1} parent=27 // pred_fallthru
          _
        %s166 = sand.u32 %s63, 1
        %s167 = scalar_lea.sflag [#allocation3], %s166
        %s168 = sand.u32 %s63, 1
        %s169 = smul.addr %s168, 48
        %s170 = scalar_lea.vmem [#allocation6], %s169
        // Predicated region
        $region33: #{tpu_custom_call.1} parent=27 // pred_check
          %p171 = pneg %p76
        $region34: #{tpu_custom_call.1} parent=27 // pred_check_branch
          %173 = sbr.rel (%p171) target = $region36
        $region35: #{tpu_custom_call.1} parent=27 // pred_region
          %174 = dma.done %s167, 768
        $region36: #{tpu_custom_call.1} parent=27 // pred_fallthru
          _
        %175 = sfence
        %p176 = pneg %p48
        %p177 = pneg %p45
        %s178 = sand.u32 %s63, 1
        %s179 = scalar_lea.sflag [#allocation3], %s178
        %s180 = sand.u32 %s63, 1
        %s181 = smul.addr %s180, 48
        %s182 = scalar_lea.vmem [#allocation6], %s181
        %p183 = pneg %p76
        %p184 = pneg %p73
        %p185 = pneg %p104
        %p186 = pneg %p101
        %s187 = sand.u32 %s91, 1
        %s188 = scalar_lea.sflag [#allocation4], %s187
        %s189 = sand.u32 %s91, 1
        %s190 = smul.addr %s189, 16
        %s191 = scalar_lea.vmem [#allocation7], %s190
        %s192 = smul.u32 2, %s25
        %s193 = smul.u32 2, %s25
        %v194 = vld [vmem:[%s170] sm:$0xff]
        %v195 = vld [vmem:[%s170 + $0x8] sm:$0xff]
        %s196 = sld [smem:[#allocation2]]
        %v197 = vstv %s196
        %v198 = vmul.f32 %v194, %v197
        %v199 = vmul.f32 %v195, %v197
        %s200 = scalar_lea.vmem %s170, 16 [#allocation6]
        %v201 = vld [vmem:[%s200] sm:$0xff]
        %v202 = vld [vmem:[%s200 + $0x8] sm:$0xff]
        %s203 = sld [smem:[#allocation2 + $0x1]]
        %v204 = vstv %s203
        %v205 = vmul.f32 %v201, %v204
        %v206 = vmul.f32 %v202, %v204
        %v207 = vadd.f32 %v198, %v205
        %v208 = vadd.f32 %v199, %v206
        %s209 = scalar_lea.vmem %s170, 32 [#allocation6]
        %v210 = vld [vmem:[%s209] sm:$0xff]
        %v211 = vld [vmem:[%s209 + $0x8] sm:$0xff]
        %s212 = sld [smem:[#allocation2 + $0x2]]
        %v213 = vstv %s212
        %v214 = vmul.f32 %v210, %v213
        %v215 = vmul.f32 %v211, %v213
        %v216 = vadd.f32 %v207, %v214
        %v217 = vadd.f32 %v208, %v215
        %218 = vst [vmem:[%s191] sm:$0xff] %v216
        %219 = vst [vmem:[%s191 + $0x8] sm:$0xff] %v217
        %s220 = sand.u32 %s91, 1
        %s221 = scalar_lea.sflag [#allocation4], %s220
        %s222 = sand.u32 %s91, 1
        %s223 = smul.addr %s222, 16
        %s224 = scalar_lea.vmem [#allocation7], %s223
        // Predicated region
        $region37: #{tpu_custom_call.1} parent=27 // pred_check
          %p225 = pneg %p101
        $region38: #{tpu_custom_call.1} parent=27 // pred_check_branch
          %227 = sbr.rel (%p225) target = $region40
        $region39: #{tpu_custom_call.1} parent=27 // pred_region
          %s228 = smul.u32 2, %s25
          %s230 = ssub.s32 256, 256
          %231 = vsyncadd %s221, %s230
          %s232 = smul.addr %s24, 2
          %s233 = sadd.s32 %s228, %s232
          %s234 = smul.addr %s233, 128
          %s235 = scalar_lea.hbm %s2, %s234
          %s237 = sshll.u32 %s224, 4
          %s238 = int_to_ptr.vmem [resolvable:$true] %s237
          %240 = dma.vmem_to_hbm [thread:$0]  %s238, 256, %s235, %s221
        $region40: #{tpu_custom_call.1} parent=27 // pred_fallthru
          _
      $region28: #{tpu_custom_call.1} parent=5 // pred_fallthru
        _
      %p241 = scmp.le.s32.totalorder 2, %s15
      // Predicated region
      $region41: #{tpu_custom_call.1} parent=5 // pred_check
        %p242 = pneg %p241
      $region42: #{tpu_custom_call.1} parent=5 // pred_check_branch
        %244 = sbr.rel (%p242) target = $region44
      $region43: #{tpu_custom_call.1} parent=5 // pred_region
        %s245 = ssub.s32 %s15, 2
        // Predicated region
        $region45: #{tpu_custom_call.1} parent=43 // pred_check
          %p246 = pneg %p107
        $region46: #{tpu_custom_call.1} parent=43 // pred_check_branch
          %248 = sbr.rel (%p246) target = $region48
        $region47: #{tpu_custom_call.1} parent=43 // pred_region
          %s249 = sand.u32 %s92, 1
          %s250 = scalar_lea.sflag [#allocation4], %s249
          %s251 = sand.u32 %s92, 1
          %s252 = smul.addr %s251, 16
          %s253 = scalar_lea.vmem [#allocation7], %s252
          %254 = dma.done %s250, 256
        $region48: #{tpu_custom_call.1} parent=43 // pred_fallthru
          _
      $region44: #{tpu_custom_call.1} parent=5 // pred_fallthru
        _
    $region6: #{tpu_custom_call.1} parent=1 // loop_footer
      %s19 = sadd.s32 1, %s15
    $region7: #{tpu_custom_call.1} parent=1 // loop_footer_branch
      %14 = sbr.rel target = $region3
    $region8: #{tpu_custom_call.1} parent=1 // loop_exit
      _
    %255 = vsyncpa [#allocation3], 1
    %s256 = scalar_lea.sflag [#allocation3], 1
    %257 = vsyncpa %s256, 1
    %258 = vsyncpa [#allocation4], 1
    %s259 = scalar_lea.sflag [#allocation4], 1
    %260 = vsyncpa %s259, 1
    %261 = vsyncpa [#allocation5], 1
    %s262 = scalar_lea.sflag [#allocation5], 1
    %263 = vsyncpa %s262, 1

</llo_original>
